<compile_context>
chip_gen: v6e
topology: v6e:2x2x1
jax: 0.10.0
libtpu: 0.0.40
codegen_flags: <defaults>
</compile_context>

<pallas_src>
import functools

import jax
import jax.numpy as jnp
from jax.experimental import pallas as pl
from jax.experimental.pallas import tpu as pltpu

# ---- module hyper-parameters (small but lane-aligned) -----------------------
HIDDEN = 128          # hidden_size
MLP = 128             # mlp_dim
N_ROUTE = 20          # future_waypoints
N_SPEED = 10          # future_speed_waypoints
N_TOTAL = N_ROUTE + N_SPEED
OUT_DIM = 2           # speed_wps_mode == '2d'
OUT_PAD = 8           # narrow padded output width (last block dim == full dim)


def _silu(x, approx):
    # SiLU = x * sigmoid(x).  exp and reciprocal both use the EUP slot.
    # Clamp so exp(-x) cannot overflow to inf for very negative x.
    e = jnp.exp(-jnp.maximum(x, -30.0))
    return x * pl.reciprocal(1.0 + e, approx=approx)


# =============================================================================
# forward(): query expansion + concat + mask (plain JAX — XLA fuses the copy).
# =============================================================================
def adaptor_forward(query_route, query_speed, batch):
    inputs = jnp.concatenate(
        [jnp.broadcast_to(query_route, (batch, N_ROUTE, HIDDEN)),
         jnp.broadcast_to(query_speed, (batch, N_SPEED, HIDDEN))], axis=1)
    inputs_mask = jnp.ones((batch, N_TOTAL), dtype=jnp.bool_)
    return {"inputs": inputs, "inputs_mask": inputs_mask}


# =============================================================================
# Fused heads kernel.  One grid step processes k whole batch elements:
#   route head: Linear(H,2M)+SiLU -> Linear(2M,M)+SiLU -> Linear(M,8pad)
#   speed head: Linear(H,M)+SiLU -> Linear(M,8pad)
# All matmuls accumulate in f32; cumsum is done by the wrapper.
# =============================================================================
def fused_heads_kernel(feat_ref,
                       rw1_ref, rb1_ref, rw2_ref, rb2_ref, rw3_ref,
                       sw1_ref, sb1_ref, sw2_ref,
                       route_o_ref, speed_o_ref, *, use_bf16):
    k = feat_ref.shape[0]
    cdt = jnp.bfloat16 if use_bf16 else jnp.float32
    approx = use_bf16                       # exact reciprocal on the f32 path

    def mm(a, b):
        return jnp.dot(a, b, preferred_element_type=jnp.float32)

    # VMEM-local split of the (k, 30, H) tile into route / speed row blocks.
    x = feat_ref[...].astype(cdt)                                  # [k, 30, H]
    xr = x[:, :N_ROUTE, :].reshape(k * N_ROUTE, HIDDEN)            # [20k, H]
    xs = x[:, N_ROUTE:, :].reshape(k * N_SPEED, HIDDEN)            # [10k, H]

    # ---- route head -----------------------------------------------------
    h = _silu(mm(xr, rw1_ref[...]) + rb1_ref[...], approx).astype(cdt)  # [20k, 2M]
    h = _silu(mm(h, rw2_ref[...]) + rb2_ref[...], approx).astype(cdt)   # [20k, M]
    yr = mm(h, rw3_ref[...])                                            # [20k, 8]
    route_o_ref[...] = yr.reshape(k, N_ROUTE, OUT_PAD)

    # ---- speed head -------------------------------------------------------
    hs = _silu(mm(xs, sw1_ref[...]) + sb1_ref[...], approx).astype(cdt)  # [10k, M]
    ys = mm(hs, sw2_ref[...])                                            # [10k, 8]
    speed_o_ref[...] = ys.reshape(k, N_SPEED, OUT_PAD)


def get_predictions(features, params, *, batches_per_tile=16, use_bf16=True):
    """features: [B, N_TOTAL, HIDDEN] (route tokens then speed tokens)."""
    B = features.shape[0]
    assert features.shape[1:] == (N_TOTAL, HIDDEN)

    # k batch elements per grid step.  No divisibility constraints on k (only
    # the last two block dims are constrained), but keep nt >= 2 when B > 1 so
    # the "parallel" grid axis can be split across v7x's two TensorCores.
    k = min(batches_per_tile, max(B, 1))
    if 1 < B <= batches_per_tile:
        k = pl.cdiv(B, 2)
    b_pad = pl.cdiv(B, k) * k
    nt = b_pad // k

    feats = features.astype(jnp.float32)
    if b_pad != B:
        feats = jnp.pad(feats, ((0, b_pad - B), (0, 0), (0, 0)))

    # Weights: pre-cast once (halves DMA bytes, no per-step VALU repack).
    # Projections padded 2 -> 8 output columns; biases stay f32.
    wdt = jnp.bfloat16 if use_bf16 else jnp.float32
    r_w1 = params["r_w1"].astype(wdt)
    r_w2 = params["r_w2"].astype(wdt)
    r_w3 = jnp.pad(params["r_w3"], ((0, 0), (0, OUT_PAD - OUT_DIM))).astype(wdt)
    s_w1 = params["s_w1"].astype(wdt)
    s_w2 = jnp.pad(params["s_w2"], ((0, 0), (0, OUT_PAD - OUT_DIM))).astype(wdt)
    r_b1 = params["r_b1"].astype(jnp.float32)
    r_b2 = params["r_b2"].astype(jnp.float32)
    s_b1 = params["s_b1"].astype(jnp.float32)

    def const_spec(arr):
        nd = arr.ndim
        # TODO(synk): pipeline_mode=pl.Buffered(1) would drop the redundant
        # second buffer for these constant-index blocks (minor VMEM saving).
        return pl.BlockSpec(arr.shape, lambda i, _n=nd: (0,) * _n)

    route_o, speed_o = pl.pallas_call(
        functools.partial(fused_heads_kernel, use_bf16=use_bf16),
        out_shape=(
            jax.ShapeDtypeStruct((b_pad, N_ROUTE, OUT_PAD), jnp.float32),
            jax.ShapeDtypeStruct((b_pad, N_SPEED, OUT_PAD), jnp.float32),
        ),
        grid=(nt,),
        in_specs=[
            # (k, 30, 128): second-to-last dim = full extent, last dim = 128.
            pl.BlockSpec((k, N_TOTAL, HIDDEN), lambda i: (i, 0, 0)),
            const_spec(r_w1), const_spec(r_b1),
            const_spec(r_w2), const_spec(r_b2), const_spec(r_w3),
            const_spec(s_w1), const_spec(s_b1), const_spec(s_w2),
        ],
        out_specs=(
            pl.BlockSpec((k, N_ROUTE, OUT_PAD), lambda i: (i, 0, 0)),
            pl.BlockSpec((k, N_SPEED, OUT_PAD), lambda i: (i, 0, 0)),
        ),
        compiler_params=pltpu.CompilerParams(
            dimension_semantics=("parallel",)),
    )(feats, r_w1, r_b1, r_w2, r_b2, r_w3, s_w1, s_b1, s_w2)

    # cumsum over tokens in the wrapper (negligible cost; XLA fuses the slice).
    route = jnp.cumsum(route_o[:B, :, :OUT_DIM], axis=1)
    speed = jnp.cumsum(speed_o[:B, :, :OUT_DIM], axis=1)
    return {"route": route, "speed_wps": speed}


# =============================================================================
# Pure-JAX reference (mirrors the PyTorch module) for validation
# =============================================================================
def reference_forward(query_route, query_speed, batch):
    return jnp.concatenate(
        [jnp.broadcast_to(query_route, (batch, N_ROUTE, HIDDEN)),
         jnp.broadcast_to(query_speed, (batch, N_SPEED, HIDDEN))], axis=1)


def reference_predictions(features, p):
    silu = lambda x: x * jax.nn.sigmoid(x)
    rf = features[:, 0:N_ROUTE]
    h = silu(rf @ p["r_w1"] + p["r_b1"])
    h = silu(h @ p["r_w2"] + p["r_b2"])
    route = jnp.cumsum(h @ p["r_w3"], axis=1)
    sf = features[:, N_ROUTE:N_TOTAL]
    h = silu(sf @ p["s_w1"] + p["s_b1"])
    speed = jnp.cumsum(h @ p["s_w2"], axis=1)
    return {"route": route, "speed_wps": speed}


# =============================================================================
if __name__ == "__main__":
    key = jax.random.PRNGKey(0)
    ks = jax.random.split(key, 12)

    # Deterministic synthetic parameters (same shapes as the nn.Module).
    query_route = 0.02 * jax.random.normal(ks[0], (1, N_ROUTE, HIDDEN), jnp.float32)
    query_speed = 0.02 * jax.random.normal(ks[1], (1, N_SPEED, HIDDEN), jnp.float32)

    params = {
        # route_head: Linear(H,2M)->SiLU->Linear(2M,M)->SiLU->Linear(M,2,no bias)
        "r_w1": 0.02 * jax.random.normal(ks[2], (HIDDEN, 2 * MLP), jnp.float32),
        "r_b1": 0.02 * jax.random.normal(ks[3], (1, 2 * MLP), jnp.float32),
        "r_w2": 0.02 * jax.random.normal(ks[4], (2 * MLP, MLP), jnp.float32),
        "r_b2": 0.02 * jax.random.normal(ks[5], (1, MLP), jnp.float32),
        "r_w3": 0.02 * jax.random.normal(ks[6], (MLP, OUT_DIM), jnp.float32),
        # speed_wps_head: Linear(H,M)->SiLU->Linear(M,2,no bias)
        "s_w1": 0.02 * jax.random.normal(ks[7], (HIDDEN, MLP), jnp.float32),
        "s_b1": 0.02 * jax.random.normal(ks[8], (1, MLP), jnp.float32),
        "s_w2": 0.02 * jax.random.normal(ks[9], (MLP, OUT_DIM), jnp.float32),
    }

    batch = 2

    # ---- forward(): query expansion + concat + mask (plain JAX) -------------
    out = adaptor_forward(query_route, query_speed, batch)
    inputs = jax.block_until_ready(out["inputs"])
    mask = jax.block_until_ready(out["inputs_mask"])
    assert inputs.shape == (batch, N_TOTAL, HIDDEN) and inputs.dtype == jnp.float32
    assert mask.shape == (batch, N_TOTAL) and mask.dtype == jnp.bool_ and bool(mask.all())
    assert jnp.allclose(inputs, reference_forward(query_route, query_speed, batch))

    # ---- get_predictions(): default path (bf16 operands, f32 accumulation) --
    features = jax.random.normal(ks[10], (batch, N_TOTAL, HIDDEN), jnp.float32)
    preds = get_predictions(features, params)                 # k=1, nt=2
    preds = jax.tree_util.tree_map(jax.block_until_ready, preds)
    ref_preds = reference_predictions(features, params)

    assert preds["route"].shape == (batch, N_ROUTE, OUT_DIM)
    assert preds["speed_wps"].shape == (batch, N_SPEED, OUT_DIM)
    assert jnp.allclose(preds["route"], ref_preds["route"], rtol=5e-2, atol=1e-2)
    assert jnp.allclose(preds["speed_wps"], ref_preds["speed_wps"], rtol=5e-2, atol=1e-2)

    # ---- larger batch: full 16-batch tiles, batch padding, grid > 1 ---------
    features34 = jax.random.normal(ks[11], (34, N_TOTAL, HIDDEN), jnp.float32)
    preds34 = get_predictions(features34, params)             # k=16, b_pad=48, nt=3
    preds34 = jax.tree_util.tree_map(jax.block_until_ready, preds34)
    ref34 = reference_predictions(features34, params)
    assert jnp.allclose(preds34["route"], ref34["route"], rtol=5e-2, atol=1e-2)
    assert jnp.allclose(preds34["speed_wps"], ref34["speed_wps"], rtol=5e-2, atol=1e-2)

    # ---- exact f32 path (exact reciprocal) matches the reference tightly ----
    preds_f32 = get_predictions(features, params, use_bf16=False)
    preds_f32 = jax.tree_util.tree_map(jax.block_until_ready, preds_f32)
    assert jnp.allclose(preds_f32["route"], ref_preds["route"], rtol=1e-3, atol=1e-3)
    assert jnp.allclose(preds_f32["speed_wps"], ref_preds["speed_wps"], rtol=1e-3, atol=1e-3)

    print("KERNEL_OK")
</pallas_src>

<mosaic_0001>
module attributes {stable_mosaic.version = 11 : i64} {
  func.func @fused_heads_kernel(%arg0: i32, %arg1: memref<1x30x128xf32, #tpu.memory_space<vmem>>, %arg2: memref<128x256xbf16, #tpu.memory_space<vmem>>, %arg3: memref<1x256xf32, #tpu.memory_space<vmem>>, %arg4: memref<256x128xbf16, #tpu.memory_space<vmem>>, %arg5: memref<1x128xf32, #tpu.memory_space<vmem>>, %arg6: memref<128x8xbf16, #tpu.memory_space<vmem>>, %arg7: memref<128x128xbf16, #tpu.memory_space<vmem>>, %arg8: memref<1x128xf32, #tpu.memory_space<vmem>>, %arg9: memref<128x8xbf16, #tpu.memory_space<vmem>>, %arg10: memref<1x20x8xf32, #tpu.memory_space<vmem>>, %arg11: memref<1x10x8xf32, #tpu.memory_space<vmem>>) attributes {dimension_semantics = [#tpu.dimension_semantics<parallel>], iteration_bounds = array<i64: 2>, scalar_prefetch = 0 : i64, scratch_operands = 0 : i64, tpu.core_type = #tpu.core_type<tc>, window_params = [{transform_indices = @transform_0, window_bounds = array<i64: 1, 30, 128>}, {pipeline_mode = #tpu.pipeline_mode<synchronous>, transform_indices = @transform_1, window_bounds = array<i64: 128, 256>}, {pipeline_mode = #tpu.pipeline_mode<synchronous>, transform_indices = @transform_2, window_bounds = array<i64: 1, 256>}, {pipeline_mode = #tpu.pipeline_mode<synchronous>, transform_indices = @transform_3, window_bounds = array<i64: 256, 128>}, {pipeline_mode = #tpu.pipeline_mode<synchronous>, transform_indices = @transform_4, window_bounds = array<i64: 1, 128>}, {pipeline_mode = #tpu.pipeline_mode<synchronous>, transform_indices = @transform_5, window_bounds = array<i64: 128, 8>}, {pipeline_mode = #tpu.pipeline_mode<synchronous>, transform_indices = @transform_6, window_bounds = array<i64: 128, 128>}, {pipeline_mode = #tpu.pipeline_mode<synchronous>, transform_indices = @transform_7, window_bounds = array<i64: 1, 128>}, {pipeline_mode = #tpu.pipeline_mode<synchronous>, transform_indices = @transform_8, window_bounds = array<i64: 128, 8>}, {transform_indices = @transform_9, window_bounds = array<i64: 1, 20, 8>}, {transform_indices = @transform_10, window_bounds = array<i64: 1, 10, 8>}]} {
    %c0 = arith.constant 0 : index
    %c0_0 = arith.constant 0 : index
    %c0_1 = arith.constant 0 : index
    %0 = vector.load %arg1[%c0, %c0_0, %c0_1] : memref<1x30x128xf32, #tpu.memory_space<vmem>>, vector<1x30x128xf32>
    %1 = arith.truncf %0 : vector<1x30x128xf32> to vector<1x30x128xbf16>
    %2 = vector.extract_strided_slice %1 {offsets = [0, 0, 0], sizes = [1, 20, 128], strides = [1, 1, 1]} : vector<1x30x128xbf16> to vector<1x20x128xbf16>
    %3 = vector.shape_cast %2 : vector<1x20x128xbf16> to vector<20x128xbf16>
    %4 = vector.extract_strided_slice %1 {offsets = [0, 20, 0], sizes = [1, 10, 128], strides = [1, 1, 1]} : vector<1x30x128xbf16> to vector<1x10x128xbf16>
    %5 = vector.shape_cast %4 : vector<1x10x128xbf16> to vector<10x128xbf16>
    %c0_2 = arith.constant 0 : index
    %c0_3 = arith.constant 0 : index
    %6 = vector.load %arg2[%c0_2, %c0_3] : memref<128x256xbf16, #tpu.memory_space<vmem>>, vector<128x256xbf16>
    %cst = arith.constant dense<0.000000e+00> : vector<20x256xf32>
    %7 = tpu.matmul %3, %6, %cst {dimension_numbers = #tpu.dot_dimension_numbers<[1], [0], [0], [1], [0, 0, 1, 1], [], []>} : vector<20x128xbf16>, vector<128x256xbf16>, vector<20x256xf32> -> vector<20x256xf32>
    %c0_4 = arith.constant 0 : index
    %c0_5 = arith.constant 0 : index
    %8 = vector.load %arg3[%c0_4, %c0_5] : memref<1x256xf32, #tpu.memory_space<vmem>>, vector<1x256xf32>
    %9 = vector.broadcast %8 : vector<1x256xf32> to vector<20x256xf32>
    %10 = arith.addf %7, %9 : vector<20x256xf32>
    %cst_6 = arith.constant -3.000000e+01 : f32
    %11 = vector.broadcast %cst_6 : f32 to vector<20x256xf32>
    %12 = arith.maximumf %10, %11 : vector<20x256xf32>
    %cst_7 = arith.constant 0.000000e+00 : f32
    %13 = vector.broadcast %cst_7 : f32 to vector<20x256xf32>
    %14 = arith.subf %13, %12 : vector<20x256xf32>
    %15 = math.exp %14 : vector<20x256xf32>
    %cst_8 = arith.constant 1.000000e+00 : f32
    %16 = vector.broadcast %cst_8 : f32 to vector<20x256xf32>
    %17 = arith.addf %16, %15 : vector<20x256xf32>
    %18 = tpu.reciprocal %17 {approx = true} : vector<20x256xf32> -> vector<20x256xf32>
    %19 = arith.mulf %10, %18 : vector<20x256xf32>
    %20 = arith.truncf %19 : vector<20x256xf32> to vector<20x256xbf16>
    %c0_9 = arith.constant 0 : index
    %c0_10 = arith.constant 0 : index
    %21 = vector.load %arg4[%c0_9, %c0_10] : memref<256x128xbf16, #tpu.memory_space<vmem>>, vector<256x128xbf16>
    %cst_11 = arith.constant dense<0.000000e+00> : vector<20x128xf32>
    %22 = tpu.matmul %20, %21, %cst_11 {dimension_numbers = #tpu.dot_dimension_numbers<[1], [0], [0], [1], [0, 0, 1, 1], [], []>} : vector<20x256xbf16>, vector<256x128xbf16>, vector<20x128xf32> -> vector<20x128xf32>
    %c0_12 = arith.constant 0 : index
    %c0_13 = arith.constant 0 : index
    %23 = vector.load %arg5[%c0_12, %c0_13] : memref<1x128xf32, #tpu.memory_space<vmem>>, vector<1x128xf32>
    %24 = vector.broadcast %23 : vector<1x128xf32> to vector<20x128xf32>
    %25 = arith.addf %22, %24 : vector<20x128xf32>
    %cst_14 = arith.constant -3.000000e+01 : f32
    %26 = vector.broadcast %cst_14 : f32 to vector<20x128xf32>
    %27 = arith.maximumf %25, %26 : vector<20x128xf32>
    %cst_15 = arith.constant 0.000000e+00 : f32
    %28 = vector.broadcast %cst_15 : f32 to vector<20x128xf32>
    %29 = arith.subf %28, %27 : vector<20x128xf32>
    %30 = math.exp %29 : vector<20x128xf32>
    %cst_16 = arith.constant 1.000000e+00 : f32
    %31 = vector.broadcast %cst_16 : f32 to vector<20x128xf32>
    %32 = arith.addf %31, %30 : vector<20x128xf32>
    %33 = tpu.reciprocal %32 {approx = true} : vector<20x128xf32> -> vector<20x128xf32>
    %34 = arith.mulf %25, %33 : vector<20x128xf32>
    %35 = arith.truncf %34 : vector<20x128xf32> to vector<20x128xbf16>
    %c0_17 = arith.constant 0 : index
    %c0_18 = arith.constant 0 : index
    %36 = vector.load %arg6[%c0_17, %c0_18] : memref<128x8xbf16, #tpu.memory_space<vmem>>, vector<128x8xbf16>
    %cst_19 = arith.constant dense<0.000000e+00> : vector<20x8xf32>
    %37 = tpu.matmul %35, %36, %cst_19 {dimension_numbers = #tpu.dot_dimension_numbers<[1], [0], [0], [1], [0, 0, 1, 1], [], []>} : vector<20x128xbf16>, vector<128x8xbf16>, vector<20x8xf32> -> vector<20x8xf32>
    %38 = vector.shape_cast %37 : vector<20x8xf32> to vector<1x20x8xf32>
    %c0_20 = arith.constant 0 : index
    %c0_21 = arith.constant 0 : index
    %c0_22 = arith.constant 0 : index
    %39 = vector.load %arg10[%c0_20, %c0_21, %c0_22] : memref<1x20x8xf32, #tpu.memory_space<vmem>>, vector<1x20x8xf32>
    tpu.vector_store %arg10[%c0_20, %c0_21, %c0_22], %38 {strides = array<i32>} : memref<1x20x8xf32, #tpu.memory_space<vmem>>, vector<1x20x8xf32>,
    %c0_23 = arith.constant 0 : index
    %c0_24 = arith.constant 0 : index
    %40 = vector.load %arg7[%c0_23, %c0_24] : memref<128x128xbf16, #tpu.memory_space<vmem>>, vector<128x128xbf16>
    %cst_25 = arith.constant dense<0.000000e+00> : vector<10x128xf32>
    %41 = tpu.matmul %5, %40, %cst_25 {dimension_numbers = #tpu.dot_dimension_numbers<[1], [0], [0], [1], [0, 0, 1, 1], [], []>} : vector<10x128xbf16>, vector<128x128xbf16>, vector<10x128xf32> -> vector<10x128xf32>
    %c0_26 = arith.constant 0 : index
    %c0_27 = arith.constant 0 : index
    %42 = vector.load %arg8[%c0_26, %c0_27] : memref<1x128xf32, #tpu.memory_space<vmem>>, vector<1x128xf32>
    %43 = vector.broadcast %42 : vector<1x128xf32> to vector<10x128xf32>
    %44 = arith.addf %41, %43 : vector<10x128xf32>
    %cst_28 = arith.constant -3.000000e+01 : f32
    %45 = vector.broadcast %cst_28 : f32 to vector<10x128xf32>
    %46 = arith.maximumf %44, %45 : vector<10x128xf32>
    %cst_29 = arith.constant 0.000000e+00 : f32
    %47 = vector.broadcast %cst_29 : f32 to vector<10x128xf32>
    %48 = arith.subf %47, %46 : vector<10x128xf32>
    %49 = math.exp %48 : vector<10x128xf32>
    %cst_30 = arith.constant 1.000000e+00 : f32
    %50 = vector.broadcast %cst_30 : f32 to vector<10x128xf32>
    %51 = arith.addf %50, %49 : vector<10x128xf32>
    %52 = tpu.reciprocal %51 {approx = true} : vector<10x128xf32> -> vector<10x128xf32>
    %53 = arith.mulf %44, %52 : vector<10x128xf32>
    %54 = arith.truncf %53 : vector<10x128xf32> to vector<10x128xbf16>
    %c0_31 = arith.constant 0 : index
    %c0_32 = arith.constant 0 : index
    %55 = vector.load %arg9[%c0_31, %c0_32] : memref<128x8xbf16, #tpu.memory_space<vmem>>, vector<128x8xbf16>
    %cst_33 = arith.constant dense<0.000000e+00> : vector<10x8xf32>
    %56 = tpu.matmul %54, %55, %cst_33 {dimension_numbers = #tpu.dot_dimension_numbers<[1], [0], [0], [1], [0, 0, 1, 1], [], []>} : vector<10x128xbf16>, vector<128x8xbf16>, vector<10x8xf32> -> vector<10x8xf32>
    %57 = vector.shape_cast %56 : vector<10x8xf32> to vector<1x10x8xf32>
    %c0_34 = arith.constant 0 : index
    %c0_35 = arith.constant 0 : index
    %c0_36 = arith.constant 0 : index
    %58 = vector.load %arg11[%c0_34, %c0_35, %c0_36] : memref<1x10x8xf32, #tpu.memory_space<vmem>>, vector<1x10x8xf32>
    tpu.vector_store %arg11[%c0_34, %c0_35, %c0_36], %57 {strides = array<i32>} : memref<1x10x8xf32, #tpu.memory_space<vmem>>, vector<1x10x8xf32>,
    return
  }
  func.func @transform_0(%arg0: i32) -> (i32, i32, i32) {
    %c0_i32 = arith.constant 0 : i32
    %c0_i32_0 = arith.constant 0 : i32
    %c0_i32_1 = arith.constant 0 : i32
    return %arg0, %c0_i32, %c0_i32_0 : i32, i32, i32
  }
  func.func @transform_1(%arg0: i32) -> (i32, i32) {
    %c0_i32 = arith.constant 0 : i32
    %c0_i32_0 = arith.constant 0 : i32
    %c0_i32_1 = arith.constant 0 : i32
    return %c0_i32, %c0_i32_0 : i32, i32
  }
  func.func @transform_2(%arg0: i32) -> (i32, i32) {
    %c0_i32 = arith.constant 0 : i32
    %c0_i32_0 = arith.constant 0 : i32
    %c0_i32_1 = arith.constant 0 : i32
    return %c0_i32, %c0_i32_0 : i32, i32
  }
  func.func @transform_3(%arg0: i32) -> (i32, i32) {
    %c0_i32 = arith.constant 0 : i32
    %c0_i32_0 = arith.constant 0 : i32
    %c0_i32_1 = arith.constant 0 : i32
    return %c0_i32, %c0_i32_0 : i32, i32
  }
  func.func @transform_4(%arg0: i32) -> (i32, i32) {
    %c0_i32 = arith.constant 0 : i32
    %c0_i32_0 = arith.constant 0 : i32
    %c0_i32_1 = arith.constant 0 : i32
    return %c0_i32, %c0_i32_0 : i32, i32
  }
  func.func @transform_5(%arg0: i32) -> (i32, i32) {
    %c0_i32 = arith.constant 0 : i32
    %c0_i32_0 = arith.constant 0 : i32
    %c0_i32_1 = arith.constant 0 : i32
    return %c0_i32, %c0_i32_0 : i32, i32
  }
  func.func @transform_6(%arg0: i32) -> (i32, i32) {
    %c0_i32 = arith.constant 0 : i32
    %c0_i32_0 = arith.constant 0 : i32
    %c0_i32_1 = arith.constant 0 : i32
    return %c0_i32, %c0_i32_0 : i32, i32
  }
  func.func @transform_7(%arg0: i32) -> (i32, i32) {
    %c0_i32 = arith.constant 0 : i32
    %c0_i32_0 = arith.constant 0 : i32
    %c0_i32_1 = arith.constant 0 : i32
    return %c0_i32, %c0_i32_0 : i32, i32
  }
  func.func @transform_8(%arg0: i32) -> (i32, i32) {
    %c0_i32 = arith.constant 0 : i32
    %c0_i32_0 = arith.constant 0 : i32
    %c0_i32_1 = arith.constant 0 : i32
    return %c0_i32, %c0_i32_0 : i32, i32
  }
  func.func @transform_9(%arg0: i32) -> (i32, i32, i32) {
    %c0_i32 = arith.constant 0 : i32
    %c0_i32_0 = arith.constant 0 : i32
    %c0_i32_1 = arith.constant 0 : i32
    return %arg0, %c0_i32, %c0_i32_0 : i32, i32, i32
  }
  func.func @transform_10(%arg0: i32) -> (i32, i32, i32) {
    %c0_i32 = arith.constant 0 : i32
    %c0_i32_0 = arith.constant 0 : i32
    %c0_i32_1 = arith.constant 0 : i32
    return %arg0, %c0_i32, %c0_i32_0 : i32, i32, i32
  }
}

</mosaic_0001>

<llo_original>
// kernel: tpu_custom_call.1
$region0: #{tpu_custom_call.1}
  #allocation0 [shape = 'u32[]', space=smem, size = 0x4, offset = 0x4, fixed_abs, tag = 'smem constant byte address 0x4 - core index']
  #allocation1 [shape = 'u32[144,128]{1,0:T(1,128)}', space=vmem, size = 0x12000, scoped, tag = 'internal scratch']
  %s0 = inlined_call_operand.vmem [shape: f32[2,30,128], index: 0, kind: input, shape index: {}]
  %s1 = inlined_call_operand.vmem [shape: bf16[128,256], index: 1, kind: input, shape index: {}]
  %s2 = inlined_call_operand.vmem [shape: f32[1,256], index: 2, kind: input, shape index: {}]
  %s3 = inlined_call_operand.vmem [shape: bf16[256,128], index: 3, kind: input, shape index: {}]
  %s4 = inlined_call_operand.vmem [shape: f32[1,128], index: 4, kind: input, shape index: {}]
  %s5 = inlined_call_operand.vmem [shape: bf16[128,8], index: 5, kind: input, shape index: {}]
  %s6 = inlined_call_operand.hbm [shape: bf16[128,128], index: 6, kind: input, shape index: {}]
  %s7 = inlined_call_operand.vmem [shape: f32[1,128], index: 7, kind: input, shape index: {}]
  %s8 = inlined_call_operand.vmem [shape: bf16[128,8], index: 8, kind: input, shape index: {}]
  %s9 = inlined_call_operand.vmem [shape: f32[2,20,8], index: 9, kind: output, shape index: {0}]
  %s10 = inlined_call_operand.vmem [shape: f32[2,10,8], index: 10, kind: output, shape index: {1}]
  %11 = xla_tuple %s9, %s10
  %s12 = sld [smem:[#allocation0]]
  $region81: #{tpu_custom_call.1} parent=0
    _
  %s14 = ssub.s32 1, %s12
  %s15 = scalar_select 0, %s14, %s12
  $region1: #{tpu_custom_call.1} parent=0
    #allocation2 [shape = 'u8[32768]{0}', space=vmem, size = 0x8000, scoped, tag = 'input window, operand 6, single buffered']
    #allocation3 [shape = 's32[2]{0}', space=sflag, size = 0x8, scoped, tag = 'scoped memory for tpu_custom_call.1']
    %16 = vsyncpa [#allocation3], 0
    loop: start=0, step=1, limit=4
    $region2: #{tpu_custom_call.1} parent=1 // loop_pre_header
      _
    $region3: #{tpu_custom_call.1} parent=1 // loop_header
      %s18 = sphi 0, %s22
      %p19 = scmp.ge.s32.totalorder %s18, 4
      %s28 = sphi 0, %s30
      %s31 = sphi 0, %s28
      %s32 = sphi 0, %s31
      %s48 = sphi 0, %s32
      %s52 = sphi 0, %s52
      %s54 = sphi 0, %s52
      %s55 = sphi 0, %s54
      %s69 = sphi 0, %s55
      %s73 = sphi 0, %s73
      %s75 = sphi 0, %s73
      %s76 = sphi 0, %s75
      %s90 = sphi 0, %s76
      %s94 = sphi 0, %s94
      %s96 = sphi 0, %s94
      %s97 = sphi 0, %s96
      %s111 = sphi 0, %s97
      %s115 = sphi 0, %s115
      %s117 = sphi 0, %s115
      %s118 = sphi 0, %s117
      %s132 = sphi 0, %s118
      %s136 = sphi 0, %s136
      %s138 = sphi 0, %s136
      %s139 = sphi 0, %s138
      %s153 = sphi 0, %s139
      %s157 = sphi 0, %s157
      %s159 = sphi 0, %s157
      %s160 = sphi 0, %s159
      %s174 = sphi 0, %s160
      %s178 = sphi 0, %s178
      %s180 = sphi 0, %s178
      %s181 = sphi 0, %s180
      %s195 = sphi 0, %s181
      %s199 = sphi 0, %s199
      %s201 = sphi 0, %s199
      %s202 = sphi 0, %s201
      %s216 = sphi 0, %s202
      %s222 = sphi 0, %s224
      %s225 = sphi 0, %s222
      %s226 = sphi 0, %s225
      %s242 = sphi 0, %s226
      %s248 = sphi 0, %s250
      %s251 = sphi 0, %s248
      %s252 = sphi 0, %s251
      %s268 = sphi 0, %s252
    $region4: #{tpu_custom_call.1} parent=1 // loop_header_branch
      %21 = sbr.rel (%p19) target = $region8
    $region5: #{tpu_custom_call.1} parent=1 // loop_body
      %s23 = ssub.s32 %s18, 1
      %s24 = ssub.s32 %s18, 2
      %s25 = sadd.s32 %s18, 1
      %s26 = ssub.s32 %s18, %s25
      %p27 = scmp.eq.s32.totalorder %s26, 0
      %s29 = sadd.s32 %s28, 1
      %s30 = scalar_select %p27, %s28, %s29
      %p33 = pneg %p27
      %p34 = scmp.eq.s32.totalorder %s18, 1
      %p35 = por %p33, %p34
      %p36 = scmp.ne.s32.totalorder %s28, %s31
      %p37 = scmp.eq.s32.totalorder %s18, 0
      %p38 = por %p36, %p37
      %p39 = scmp.ne.s32.totalorder %s28, %s31
      %p40 = scmp.eq.s32.totalorder %s23, 1
      %p41 = por %p39, %p40
      %p42 = scmp.ne.s32.totalorder %s31, %s32
      %p43 = scmp.eq.s32.totalorder %s23, 0
      %p44 = por %p42, %p43
      %p45 = scmp.ne.s32.totalorder %s31, %s32
      %p46 = scmp.eq.s32.totalorder %s24, 1
      %p47 = por %p45, %p46
      %p49 = scmp.ne.s32.totalorder %s32, %s48
      %p50 = scmp.eq.s32.totalorder %s24, 0
      %p51 = por %p49, %p50
      %s53 = sadd.s32 %s52, 1
      %p56 = scmp.eq.s32.totalorder %s18, 1
      %p57 = scmp.ne.s32.totalorder %s52, %s54
      %p58 = scmp.eq.s32.totalorder %s18, 0
      %p59 = por %p57, %p58
      %p60 = scmp.ne.s32.totalorder %s52, %s54
      %p61 = scmp.eq.s32.totalorder %s23, 1
      %p62 = por %p60, %p61
      %p63 = scmp.ne.s32.totalorder %s54, %s55
      %p64 = scmp.eq.s32.totalorder %s23, 0
      %p65 = por %p63, %p64
      %p66 = scmp.ne.s32.totalorder %s54, %s55
      %p67 = scmp.eq.s32.totalorder %s24, 1
      %p68 = por %p66, %p67
      %p70 = scmp.ne.s32.totalorder %s55, %s69
      %p71 = scmp.eq.s32.totalorder %s24, 0
      %p72 = por %p70, %p71
      %s74 = sadd.s32 %s73, 1
      %p77 = scmp.eq.s32.totalorder %s18, 1
      %p78 = scmp.ne.s32.totalorder %s73, %s75
      %p79 = scmp.eq.s32.totalorder %s18, 0
      %p80 = por %p78, %p79
      %p81 = scmp.ne.s32.totalorder %s73, %s75
      %p82 = scmp.eq.s32.totalorder %s23, 1
      %p83 = por %p81, %p82
      %p84 = scmp.ne.s32.totalorder %s75, %s76
      %p85 = scmp.eq.s32.totalorder %s23, 0
      %p86 = por %p84, %p85
      %p87 = scmp.ne.s32.totalorder %s75, %s76
      %p88 = scmp.eq.s32.totalorder %s24, 1
      %p89 = por %p87, %p88
      %p91 = scmp.ne.s32.totalorder %s76, %s90
      %p92 = scmp.eq.s32.totalorder %s24, 0
      %p93 = por %p91, %p92
      %s95 = sadd.s32 %s94, 1
      %p98 = scmp.eq.s32.totalorder %s18, 1
      %p99 = scmp.ne.s32.totalorder %s94, %s96
      %p100 = scmp.eq.s32.totalorder %s18, 0
      %p101 = por %p99, %p100
      %p102 = scmp.ne.s32.totalorder %s94, %s96
      %p103 = scmp.eq.s32.totalorder %s23, 1
      %p104 = por %p102, %p103
      %p105 = scmp.ne.s32.totalorder %s96, %s97
      %p106 = scmp.eq.s32.totalorder %s23, 0
      %p107 = por %p105, %p106
      %p108 = scmp.ne.s32.totalorder %s96, %s97
      %p109 = scmp.eq.s32.totalorder %s24, 1
      %p110 = por %p108, %p109
      %p112 = scmp.ne.s32.totalorder %s97, %s111
      %p113 = scmp.eq.s32.totalorder %s24, 0
      %p114 = por %p112, %p113
      %s116 = sadd.s32 %s115, 1
      %p119 = scmp.eq.s32.totalorder %s18, 1
      %p120 = scmp.ne.s32.totalorder %s115, %s117
      %p121 = scmp.eq.s32.totalorder %s18, 0
      %p122 = por %p120, %p121
      %p123 = scmp.ne.s32.totalorder %s115, %s117
      %p124 = scmp.eq.s32.totalorder %s23, 1
      %p125 = por %p123, %p124
      %p126 = scmp.ne.s32.totalorder %s117, %s118
      %p127 = scmp.eq.s32.totalorder %s23, 0
      %p128 = por %p126, %p127
      %p129 = scmp.ne.s32.totalorder %s117, %s118
      %p130 = scmp.eq.s32.totalorder %s24, 1
      %p131 = por %p129, %p130
      %p133 = scmp.ne.s32.totalorder %s118, %s132
      %p134 = scmp.eq.s32.totalorder %s24, 0
      %p135 = por %p133, %p134
      %s137 = sadd.s32 %s136, 1
      %p140 = scmp.eq.s32.totalorder %s18, 1
      %p141 = scmp.ne.s32.totalorder %s136, %s138
      %p142 = scmp.eq.s32.totalorder %s18, 0
      %p143 = por %p141, %p142
      %p144 = scmp.ne.s32.totalorder %s136, %s138
      %p145 = scmp.eq.s32.totalorder %s23, 1
      %p146 = por %p144, %p145
      %p147 = scmp.ne.s32.totalorder %s138, %s139
      %p148 = scmp.eq.s32.totalorder %s23, 0
      %p149 = por %p147, %p148
      %p150 = scmp.ne.s32.totalorder %s138, %s139
      %p151 = scmp.eq.s32.totalorder %s24, 1
      %p152 = por %p150, %p151
      %p154 = scmp.ne.s32.totalorder %s139, %s153
      %p155 = scmp.eq.s32.totalorder %s24, 0
      %p156 = por %p154, %p155
      %s158 = sadd.s32 %s157, 1
      %p161 = scmp.eq.s32.totalorder %s18, 1
      %p162 = scmp.ne.s32.totalorder %s157, %s159
      %p163 = scmp.eq.s32.totalorder %s18, 0
      %p164 = por %p162, %p163
      %p165 = scmp.ne.s32.totalorder %s157, %s159
      %p166 = scmp.eq.s32.totalorder %s23, 1
      %p167 = por %p165, %p166
      %p168 = scmp.ne.s32.totalorder %s159, %s160
      %p169 = scmp.eq.s32.totalorder %s23, 0
      %p170 = por %p168, %p169
      %p171 = scmp.ne.s32.totalorder %s159, %s160
      %p172 = scmp.eq.s32.totalorder %s24, 1
      %p173 = por %p171, %p172
      %p175 = scmp.ne.s32.totalorder %s160, %s174
      %p176 = scmp.eq.s32.totalorder %s24, 0
      %p177 = por %p175, %p176
      %s179 = sadd.s32 %s178, 1
      %p182 = scmp.eq.s32.totalorder %s18, 1
      %p183 = scmp.ne.s32.totalorder %s178, %s180
      %p184 = scmp.eq.s32.totalorder %s18, 0
      %p185 = por %p183, %p184
      %p186 = scmp.ne.s32.totalorder %s178, %s180
      %p187 = scmp.eq.s32.totalorder %s23, 1
      %p188 = por %p186, %p187
      %p189 = scmp.ne.s32.totalorder %s180, %s181
      %p190 = scmp.eq.s32.totalorder %s23, 0
      %p191 = por %p189, %p190
      %p192 = scmp.ne.s32.totalorder %s180, %s181
      %p193 = scmp.eq.s32.totalorder %s24, 1
      %p194 = por %p192, %p193
      %p196 = scmp.ne.s32.totalorder %s181, %s195
      %p197 = scmp.eq.s32.totalorder %s24, 0
      %p198 = por %p196, %p197
      %s200 = sadd.s32 %s199, 1
      %p203 = scmp.eq.s32.totalorder %s18, 1
      %p204 = scmp.ne.s32.totalorder %s199, %s201
      %p205 = scmp.eq.s32.totalorder %s18, 0
      %p206 = por %p204, %p205
      %p207 = scmp.ne.s32.totalorder %s199, %s201
      %p208 = scmp.eq.s32.totalorder %s23, 1
      %p209 = por %p207, %p208
      %p210 = scmp.ne.s32.totalorder %s201, %s202
      %p211 = scmp.eq.s32.totalorder %s23, 0
      %p212 = por %p210, %p211
      %p213 = scmp.ne.s32.totalorder %s201, %s202
      %p214 = scmp.eq.s32.totalorder %s24, 1
      %p215 = por %p213, %p214
      %p217 = scmp.ne.s32.totalorder %s202, %s216
      %p218 = scmp.eq.s32.totalorder %s24, 0
      %p219 = por %p217, %p218
      %s220 = ssub.s32 %s18, %s25
      %p221 = scmp.eq.s32.totalorder %s220, 0
      %s223 = sadd.s32 %s222, 1
      %s224 = scalar_select %p221, %s222, %s223
      %p227 = pneg %p221
      %p228 = scmp.eq.s32.totalorder %s18, 1
      %p229 = por %p227, %p228
      %p230 = scmp.ne.s32.totalorder %s222, %s225
      %p231 = scmp.eq.s32.totalorder %s18, 0
      %p232 = por %p230, %p231
      %p233 = scmp.ne.s32.totalorder %s222, %s225
      %p234 = scmp.eq.s32.totalorder %s23, 1
      %p235 = por %p233, %p234
      %p236 = scmp.ne.s32.totalorder %s225, %s226
      %p237 = scmp.eq.s32.totalorder %s23, 0
      %p238 = por %p236, %p237
      %p239 = scmp.ne.s32.totalorder %s225, %s226
      %p240 = scmp.eq.s32.totalorder %s24, 1
      %p241 = por %p239, %p240
      %p243 = scmp.ne.s32.totalorder %s226, %s242
      %p244 = scmp.eq.s32.totalorder %s24, 0
      %p245 = por %p243, %p244
      %s246 = ssub.s32 %s18, %s25
      %p247 = scmp.eq.s32.totalorder %s246, 0
      %s249 = sadd.s32 %s248, 1
      %s250 = scalar_select %p247, %s248, %s249
      %p253 = pneg %p247
      %p254 = scmp.eq.s32.totalorder %s18, 1
      %p255 = por %p253, %p254
      %p256 = scmp.ne.s32.totalorder %s248, %s251
      %p257 = scmp.eq.s32.totalorder %s18, 0
      %p258 = por %p256, %p257
      %p259 = scmp.ne.s32.totalorder %s248, %s251
      %p260 = scmp.eq.s32.totalorder %s23, 1
      %p261 = por %p259, %p260
      %p262 = scmp.ne.s32.totalorder %s251, %s252
      %p263 = scmp.eq.s32.totalorder %s23, 0
      %p264 = por %p262, %p263
      %p265 = scmp.ne.s32.totalorder %s251, %s252
      %p266 = scmp.eq.s32.totalorder %s24, 1
      %p267 = por %p265, %p266
      %p269 = scmp.ne.s32.totalorder %s252, %s268
      %p270 = scmp.eq.s32.totalorder %s24, 0
      %p271 = por %p269, %p270
      %p272 = scmp.le.s32.totalorder 1, %s18
      %p273 = scmp.lt.s32.totalorder %s18, 3
      %p274 = pnand %p272, %p273
      %p275 = pneg %p274
      // Predicated region
      $region9: #{tpu_custom_call.1} parent=5 // pred_check
        _
      $region10: #{tpu_custom_call.1} parent=5 // pred_check_branch
        %277 = sbr.rel (%p274) target = $region12
      $region11: #{tpu_custom_call.1} parent=5 // pred_region
        %s278 = ssub.s32 %s18, 1
        // Predicated region
        $region13: #{tpu_custom_call.1} parent=11 // pred_check
          %p279 = pneg %p65
        $region14: #{tpu_custom_call.1} parent=11 // pred_check_branch
          %281 = sbr.rel (%p279) target = $region16
        $region15: #{tpu_custom_call.1} parent=11 // pred_region
          _
        $region16: #{tpu_custom_call.1} parent=11 // pred_fallthru
          _
        // Predicated region
        $region17: #{tpu_custom_call.1} parent=11 // pred_check
          %p282 = pneg %p86
        $region18: #{tpu_custom_call.1} parent=11 // pred_check_branch
          %284 = sbr.rel (%p282) target = $region20
        $region19: #{tpu_custom_call.1} parent=11 // pred_region
          _
        $region20: #{tpu_custom_call.1} parent=11 // pred_fallthru
          _
        // Predicated region
        $region21: #{tpu_custom_call.1} parent=11 // pred_check
          %p285 = pneg %p107
        $region22: #{tpu_custom_call.1} parent=11 // pred_check_branch
          %287 = sbr.rel (%p285) target = $region24
        $region23: #{tpu_custom_call.1} parent=11 // pred_region
          _
        $region24: #{tpu_custom_call.1} parent=11 // pred_fallthru
          _
        // Predicated region
        $region25: #{tpu_custom_call.1} parent=11 // pred_check
          %p288 = pneg %p128
        $region26: #{tpu_custom_call.1} parent=11 // pred_check_branch
          %290 = sbr.rel (%p288) target = $region28
        $region27: #{tpu_custom_call.1} parent=11 // pred_region
          _
        $region28: #{tpu_custom_call.1} parent=11 // pred_fallthru
          _
        // Predicated region
        $region29: #{tpu_custom_call.1} parent=11 // pred_check
          %p291 = pneg %p149
        $region30: #{tpu_custom_call.1} parent=11 // pred_check_branch
          %293 = sbr.rel (%p291) target = $region32
        $region31: #{tpu_custom_call.1} parent=11 // pred_region
          _
        $region32: #{tpu_custom_call.1} parent=11 // pred_fallthru
          _
        // Predicated region
        $region33: #{tpu_custom_call.1} parent=11 // pred_check
          %p294 = pneg %p170
        $region34: #{tpu_custom_call.1} parent=11 // pred_check_branch
          %296 = sbr.rel (%p294) target = $region36
        $region35: #{tpu_custom_call.1} parent=11 // pred_region
          %s298 = ssub.s32 1024, 1024
          %299 = vsyncadd [#allocation3], %s298
          %s300 = sshll.u32 [#allocation2], 4
          %s301 = int_to_ptr.vmem [resolvable:$true] %s300
          %306 = dma.hbm_to_vmem [thread:$0]  %s6, 1024, %s301, [#allocation3], 64, 64, 4
        $region36: #{tpu_custom_call.1} parent=11 // pred_fallthru
          _
        // Predicated region
        $region37: #{tpu_custom_call.1} parent=11 // pred_check
          %p307 = pneg %p191
        $region38: #{tpu_custom_call.1} parent=11 // pred_check_branch
          %309 = sbr.rel (%p307) target = $region40
        $region39: #{tpu_custom_call.1} parent=11 // pred_region
          _
        $region40: #{tpu_custom_call.1} parent=11 // pred_fallthru
          _
        // Predicated region
        $region41: #{tpu_custom_call.1} parent=11 // pred_check
          %p310 = pneg %p212
        $region42: #{tpu_custom_call.1} parent=11 // pred_check_branch
          %312 = sbr.rel (%p310) target = $region44
        $region43: #{tpu_custom_call.1} parent=11 // pred_region
          _
        $region44: #{tpu_custom_call.1} parent=11 // pred_fallthru
          _
      $region12: #{tpu_custom_call.1} parent=5 // pred_fallthru
        _
      %p313 = scmp.lt.s32.totalorder %s18, 2
      // Predicated region
      $region45: #{tpu_custom_call.1} parent=5 // pred_check
        %p314 = pneg %p313
      $region46: #{tpu_custom_call.1} parent=5 // pred_check_branch
        %316 = sbr.rel (%p314) target = $region48
      $region47: #{tpu_custom_call.1} parent=5 // pred_region
        // Predicated region
        $region49: #{tpu_custom_call.1} parent=47 // pred_check
          %p317 = pneg %p38
        $region50: #{tpu_custom_call.1} parent=47 // pred_check_branch
          %319 = sbr.rel (%p317) target = $region52
        $region51: #{tpu_custom_call.1} parent=47 // pred_region
          %p320 = scmp.lt.s32.totalorder %s18, 1
          %s321 = scalar_select %p320, %s18, 1
          %s322 = smul.addr %s321, 4
          %s323 = smul.addr %s322, 8
          %s324 = scalar_lea.vmem %s0, %s323
        $region52: #{tpu_custom_call.1} parent=47 // pred_fallthru
          _
      $region48: #{tpu_custom_call.1} parent=5 // pred_fallthru
        _
      %p325 = scmp.le.s32.totalorder 1, %s18
      %p326 = scmp.lt.s32.totalorder %s18, 3
      %p327 = pnand %p325, %p326
      %p328 = pneg %p327
      // Predicated region
      $region53: #{tpu_custom_call.1} parent=5 // pred_check
        _
      $region54: #{tpu_custom_call.1} parent=5 // pred_check_branch
        %330 = sbr.rel (%p327) target = $region56
      $region55: #{tpu_custom_call.1} parent=5 // pred_region
        %s331 = ssub.s32 %s18, 1
        // Predicated region
        $region57: #{tpu_custom_call.1} parent=55 // pred_check
          %p332 = pneg %p170
        $region58: #{tpu_custom_call.1} parent=55 // pred_check_branch
          %334 = sbr.rel (%p332) target = $region60
        $region59: #{tpu_custom_call.1} parent=55 // pred_region
          %335 = dma.done [#allocation3], 1024
        $region60: #{tpu_custom_call.1} parent=55 // pred_fallthru
          _
        %p336 = scmp.lt.s32.totalorder %s23, 1
        %s337 = scalar_select %p336, %s23, 1
        %s338 = smul.addr %s337, 4
        %s339 = smul.addr %s338, 8
        %s340 = scalar_lea.vmem %s0, %s339
        %p341 = pneg %p44
        %p342 = pneg %p41
        %p343 = pneg %p65
        %p344 = pneg %p62
        %p345 = pneg %p86
        %p346 = pneg %p83
        %p347 = pneg %p107
        %p348 = pneg %p104
        %p349 = pneg %p128
        %p350 = pneg %p125
        %p351 = pneg %p149
        %p352 = pneg %p146
        %p353 = pneg %p170
        %p354 = pneg %p167
        %p355 = pneg %p191
        %p356 = pneg %p188
        %p357 = pneg %p212
        %p358 = pneg %p209
        %p359 = pneg %p238
        %p360 = pneg %p235
        %p361 = scmp.lt.s32.totalorder %s23, 1
        %s362 = scalar_select %p361, %s23, 1
        %s363 = smul.addr %s362, 3
        %s364 = smul.addr %s363, 8
        %s365 = scalar_lea.vmem %s9, %s364
        %p366 = pneg %p264
        %p367 = pneg %p261
        %p368 = scmp.lt.s32.totalorder %s23, 1
        %s369 = scalar_select %p368, %s23, 1
        %s370 = smul.addr %s369, 2
        %s371 = smul.addr %s370, 8
        %s372 = scalar_lea.vmem %s10, %s371
        %p373 = scmp.lt.s32.totalorder %s23, 1
        %s374 = scalar_select %p373, %s23, 1
        %s375 = smul.addr %s374, 4
        %s376 = smul.addr %s375, 8
        %s377 = scalar_lea.vmem %s0, %s376
        %p378 = scmp.lt.s32.totalorder %s23, 1
        %s379 = scalar_select %p378, %s23, 1
        %s380 = smul.addr %s379, 3
        %s381 = smul.addr %s380, 8
        %s382 = scalar_lea.vmem %s9, %s381
        %p383 = scmp.lt.s32.totalorder %s23, 1
        %s384 = scalar_select %p383, %s23, 1
        %s385 = smul.addr %s384, 2
        %s386 = smul.addr %s385, 8
        %s387 = scalar_lea.vmem %s10, %s386
        %v389 = vld [vmem:[%s377] sm:$0xff]
        %v390 = vld [vmem:[%s377 + $0x8] sm:$0xff]
        %v391 = vld [vmem:[%s377 + $0x10] sm:$0xff]
        %v392 = vld [vmem:[%s377 + $0x18] sm:$0x3f]
        %v393 = vpack.c.bf16 %v390, %v389
        %v394 = vpack.c.bf16 %v392, %v391
        %v395 = vld [vmem:[%s1] sm:$0xff]
        %v396 = vld [vmem:[%s1 + $0x8] sm:$0xff]
        %v397 = vld [vmem:[%s1 + $0x10] sm:$0xff]
        %v398 = vld [vmem:[%s1 + $0x18] sm:$0xff]
        %v399 = vld [vmem:[%s1 + $0x20] sm:$0xff]
        %v400 = vld [vmem:[%s1 + $0x28] sm:$0xff]
        %v401 = vld [vmem:[%s1 + $0x30] sm:$0xff]
        %v402 = vld [vmem:[%s1 + $0x38] sm:$0xff]
        %v403 = vld [vmem:[%s1 + $0x40] sm:$0xff]
        %v404 = vld [vmem:[%s1 + $0x48] sm:$0xff]
        %v405 = vld [vmem:[%s1 + $0x50] sm:$0xff]
        %v406 = vld [vmem:[%s1 + $0x58] sm:$0xff]
        %v407 = vld [vmem:[%s1 + $0x60] sm:$0xff]
        %v408 = vld [vmem:[%s1 + $0x68] sm:$0xff]
        %v409 = vld [vmem:[%s1 + $0x70] sm:$0xff]
        %v410 = vld [vmem:[%s1 + $0x78] sm:$0xff]
        %v411 = vld [vmem:[%s2] sm:$0x3]
        %v413 = vlaneseq
        %v414 = vshrl.u32 %v413, 7
        %v415 = vsub.s32 0, %v414
        %v416 = vrot.slane %v411, %v415
        %v417 = vlaneseq
        %v418 = vshrl.u32 %v417, 7
        %v419 = vsub.s32 1, %v418
        %v420 = vrot.slane %v411, %v419
        %v439 = vunpack.c.l.b16 %v395
        %v440 = vunpack.c.h.b16 %v395
        %v441 = vunpack.c.l.b16 %v396
        %v442 = vunpack.c.h.b16 %v396
        %v443 = vunpack.c.l.b16 %v397
        %v444 = vunpack.c.h.b16 %v397
        %v445 = vunpack.c.l.b16 %v398
        %v446 = vunpack.c.h.b16 %v398
        %v447 = vunpack.c.l.b16 %v399
        %v448 = vunpack.c.h.b16 %v399
        %v449 = vunpack.c.l.b16 %v400
        %v450 = vunpack.c.h.b16 %v400
        %v451 = vunpack.c.l.b16 %v401
        %v452 = vunpack.c.h.b16 %v401
        %v453 = vunpack.c.l.b16 %v402
        %v454 = vunpack.c.h.b16 %v402
        %v455 = vunpack.c.l.b16 %v403
        %v456 = vunpack.c.h.b16 %v403
        %v457 = vunpack.c.l.b16 %v404
        %v458 = vunpack.c.h.b16 %v404
        %v459 = vunpack.c.l.b16 %v405
        %v460 = vunpack.c.h.b16 %v405
        %v461 = vunpack.c.l.b16 %v406
        %v462 = vunpack.c.h.b16 %v406
        %v463 = vunpack.c.l.b16 %v407
        %v464 = vunpack.c.h.b16 %v407
        %v465 = vunpack.c.l.b16 %v408
        %v466 = vunpack.c.h.b16 %v408
        %v467 = vunpack.c.l.b16 %v409
        %v468 = vunpack.c.h.b16 %v409
        %v469 = vunpack.c.l.b16 %v410
        %v470 = vunpack.c.h.b16 %v410
        %v471 = vpack.c.b16 %v441, %v439
        %v472 = vpack.c.b16 %v442, %v440
        %v473 = vpack.c.b16 %v445, %v443
        %v474 = vpack.c.b16 %v446, %v444
        %v475 = vpack.c.b16 %v449, %v447
        %v476 = vpack.c.b16 %v450, %v448
        %v477 = vpack.c.b16 %v453, %v451
        %v478 = vpack.c.b16 %v454, %v452
        %v479 = vpack.c.b16 %v457, %v455
        %v480 = vpack.c.b16 %v458, %v456
        %v481 = vpack.c.b16 %v461, %v459
        %v482 = vpack.c.b16 %v462, %v460
        %v483 = vpack.c.b16 %v465, %v463
        %v484 = vpack.c.b16 %v466, %v464
        %v485 = vpack.c.b16 %v469, %v467
        %v486 = vpack.c.b16 %v470, %v468
        %503 = vmatprep.subr.bf16.mxu0 %v486
        %504 = vmatpush1.bf16.msra.mxu0 %v485
        %505 = vmatprep.subr.bf16.mxu0 %v484
        %506 = vmatpush1.bf16.msra.mxu0 %v483
        %507 = vmatprep.subr.bf16.mxu0 %v482
        %508 = vmatpush1.bf16.msra.mxu0 %v481
        %509 = vmatprep.subr.bf16.mxu0 %v480
        %510 = vmatpush1.bf16.msra.mxu0 %v479
        %511 = vmatprep.subr.bf16.mxu0 %v478
        %512 = vmatpush1.bf16.msra.mxu0 %v477
        %513 = vmatprep.subr.bf16.mxu0 %v476
        %514 = vmatpush1.bf16.msra.mxu0 %v475
        %515 = vmatprep.subr.bf16.mxu0 %v474
        %516 = vmatpush1.bf16.msra.mxu0 %v473
        %517 = vmatprep.subr.bf16.mxu0 %v472
        %518 = vmatpush1.bf16.msra.mxu0 %v471
        %519 = vmatprep.subr.bf16.mxu0 0
        %520 = vmatpush2.bf16.msra.mxu0 0
        %521 = vmatprep.subr.bf16.mxu0 0
        %522 = vmatpush2.bf16.msra.mxu0 0
        %523 = vmatprep.subr.bf16.mxu0 0
        %524 = vmatpush2.bf16.msra.mxu0 0
        %525 = vmatprep.subr.bf16.mxu0 0
        %526 = vmatpush2.bf16.msra.mxu0 0
        %527 = vmatprep.subr.bf16.mxu0 0
        %528 = vmatpush2.bf16.msra.mxu0 0
        %529 = vmatprep.subr.bf16.mxu0 0
        %530 = vmatpush2.bf16.msra.mxu0 0
        %531 = vmatprep.subr.bf16.mxu0 0
        %532 = vmatpush2.bf16.msra.mxu0 0
        %533 = vmatprep.subr.bf16.mxu0 0
        %534 = vmatpush2.bf16.msra.mxu0 0
        %535 = vmatprep.mubr.bf16.mxu0 0
        %536 = vmatmul.mubr.bf16.gmra.mxu0 %v393
        %v537 = vpop.f32.mrf.mxu0
        %v538 = vadd.f32 %v416, %v537
        %v539 = vpop.f32.mrf.mxu0
        %v540 = vadd.f32 %v420, %v539
        %v541 = vpop.f32.mrf.mxu0
        %v542 = vadd.f32 %v416, %v541
        %v543 = vpop.f32.mrf.mxu0
        %v544 = vadd.f32 %v420, %v543
        %545 = vmatprep.mubr.bf16.mxu0 0
        %546 = vmatmul.mubr.bf16.gmra.mxu0 %v394
        %v547 = vpop.f32.mrf.mxu0
        %v548 = vadd.f32 %v416, %v547
        %v549 = vpop.f32.mrf.mxu0
        %v550 = vadd.f32 %v420, %v549
        %v551 = vpop.f32.mrf.mxu0
        %v552 = vpop.f32.mrf.mxu0
        %553 = vdwg.mxu0
        %v554 = vmax.f32 %v538, -30.0
        %v555 = vmax.f32 %v540, -30.0
        %v556 = vmax.f32 %v542, -30.0
        %v557 = vmax.f32 %v544, -30.0
        %v558 = vmax.f32 %v548, -30.0
        %v559 = vmax.f32 %v550, -30.0
        %v560 = vsub.f32 0.0, %v554
        %v561 = vsub.f32 0.0, %v555
        %v562 = vsub.f32 0.0, %v556
        %v563 = vsub.f32 0.0, %v557
        %v564 = vsub.f32 0.0, %v558
        %v565 = vsub.f32 0.0, %v559
        %v566 = vmul.f32 %v560, 1.442695
        %v567 = vpow.pop %v566
        %v568 = vmul.f32 %v561, 1.442695
        %v569 = vpow.pop %v568
        %v570 = vmul.f32 %v562, 1.442695
        %v571 = vpow.pop %v570
        %v572 = vmul.f32 %v563, 1.442695
        %v573 = vpow.pop %v572
        %v574 = vmul.f32 %v564, 1.442695
        %v575 = vpow.pop %v574
        %v576 = vmul.f32 %v565, 1.442695
        %v577 = vpow.pop %v576
        %v578 = vadd.f32 %v567, 1.0
        %v579 = vadd.f32 %v569, 1.0
        %v580 = vadd.f32 %v571, 1.0
        %v581 = vadd.f32 %v573, 1.0
        %v582 = vadd.f32 %v575, 1.0
        %v583 = vadd.f32 %v577, 1.0
        %v584 = vrcp.pop %v578
        %v585 = vrcp.pop %v579
        %v586 = vrcp.pop %v580
        %v587 = vrcp.pop %v581
        %v588 = vrcp.pop %v582
        %v589 = vrcp.pop %v583
        %v590 = vmul.f32 %v538, %v584
        %v591 = vmul.f32 %v540, %v585
        %v592 = vmul.f32 %v542, %v586
        %v593 = vmul.f32 %v544, %v587
        %v594 = vmul.f32 %v548, %v588
        %v595 = vmul.f32 %v550, %v589
        %v596 = vpack.c.bf16 %v592, %v590
        %v597 = vpack.c.bf16 %v593, %v591
        %v598 = vpack.c.bf16 %v594, %v594
        %v599 = vpack.c.bf16 %v595, %v595
        %v600 = vld [vmem:[%s3] sm:$0xf]
        %v601 = vld [vmem:[%s3 + $0x4] sm:$0xf]
        %v602 = vld [vmem:[%s3 + $0x8] sm:$0xf]
        %v603 = vld [vmem:[%s3 + $0xc] sm:$0xf]
        %v604 = vld [vmem:[%s3 + $0x10] sm:$0xf]
        %v605 = vld [vmem:[%s3 + $0x14] sm:$0xf]
        %v606 = vld [vmem:[%s3 + $0x18] sm:$0xf]
        %v607 = vld [vmem:[%s3 + $0x1c] sm:$0xf]
        %v608 = vld [vmem:[%s3 + $0x20] sm:$0xf]
        %v609 = vld [vmem:[%s3 + $0x24] sm:$0xf]
        %v610 = vld [vmem:[%s3 + $0x28] sm:$0xf]
        %v611 = vld [vmem:[%s3 + $0x2c] sm:$0xf]
        %v612 = vld [vmem:[%s3 + $0x30] sm:$0xf]
        %v613 = vld [vmem:[%s3 + $0x34] sm:$0xf]
        %v614 = vld [vmem:[%s3 + $0x38] sm:$0xf]
        %v615 = vld [vmem:[%s3 + $0x3c] sm:$0xf]
        %v616 = vld [vmem:[%s3 + $0x40] sm:$0xf]
        %v617 = vld [vmem:[%s3 + $0x44] sm:$0xf]
        %v618 = vld [vmem:[%s3 + $0x48] sm:$0xf]
        %v619 = vld [vmem:[%s3 + $0x4c] sm:$0xf]
        %v620 = vld [vmem:[%s3 + $0x50] sm:$0xf]
        %v621 = vld [vmem:[%s3 + $0x54] sm:$0xf]
        %v622 = vld [vmem:[%s3 + $0x58] sm:$0xf]
        %v623 = vld [vmem:[%s3 + $0x5c] sm:$0xf]
        %v624 = vld [vmem:[%s3 + $0x60] sm:$0xf]
        %v625 = vld [vmem:[%s3 + $0x64] sm:$0xf]
        %v626 = vld [vmem:[%s3 + $0x68] sm:$0xf]
        %v627 = vld [vmem:[%s3 + $0x6c] sm:$0xf]
        %v628 = vld [vmem:[%s3 + $0x70] sm:$0xf]
        %v629 = vld [vmem:[%s3 + $0x74] sm:$0xf]
        %v630 = vld [vmem:[%s3 + $0x78] sm:$0xf]
        %v631 = vld [vmem:[%s3 + $0x7c] sm:$0xf]
        %v632 = vld [vmem:[%s4] sm:$0x1]
        %v634 = vlaneseq
        %v635 = vshrl.u32 %v634, 7
        %v636 = vsub.s32 0, %v635
        %v637 = vrot.slane %v632, %v636
        %v671 = vunpack.c.l.b16 %v600
        %v672 = vunpack.c.l.b16 %v601
        %v673 = vunpack.c.l.b16 %v602
        %v674 = vunpack.c.l.b16 %v603
        %v675 = vunpack.c.l.b16 %v604
        %v676 = vunpack.c.l.b16 %v605
        %v677 = vunpack.c.l.b16 %v606
        %v678 = vunpack.c.l.b16 %v607
        %v679 = vunpack.c.l.b16 %v608
        %v680 = vunpack.c.l.b16 %v609
        %v681 = vunpack.c.l.b16 %v610
        %v682 = vunpack.c.l.b16 %v611
        %v683 = vunpack.c.l.b16 %v612
        %v684 = vunpack.c.l.b16 %v613
        %v685 = vunpack.c.l.b16 %v614
        %v686 = vunpack.c.l.b16 %v615
        %v687 = vunpack.c.l.b16 %v616
        %v688 = vunpack.c.l.b16 %v617
        %v689 = vunpack.c.l.b16 %v618
        %v690 = vunpack.c.l.b16 %v619
        %v691 = vunpack.c.l.b16 %v620
        %v692 = vunpack.c.l.b16 %v621
        %v693 = vunpack.c.l.b16 %v622
        %v694 = vunpack.c.l.b16 %v623
        %v695 = vunpack.c.l.b16 %v624
        %v696 = vunpack.c.l.b16 %v625
        %v697 = vunpack.c.l.b16 %v626
        %v698 = vunpack.c.l.b16 %v627
        %v699 = vunpack.c.l.b16 %v628
        %v700 = vunpack.c.l.b16 %v629
        %v701 = vunpack.c.l.b16 %v630
        %v702 = vunpack.c.l.b16 %v631
        %v703 = vpack.c.b16 %v672, %v671
        %v704 = vpack.c.b16 %v674, %v673
        %v705 = vpack.c.b16 %v676, %v675
        %v706 = vpack.c.b16 %v678, %v677
        %v707 = vpack.c.b16 %v680, %v679
        %v708 = vpack.c.b16 %v682, %v681
        %v709 = vpack.c.b16 %v684, %v683
        %v710 = vpack.c.b16 %v686, %v685
        %v711 = vpack.c.b16 %v688, %v687
        %v712 = vpack.c.b16 %v690, %v689
        %v713 = vpack.c.b16 %v692, %v691
        %v714 = vpack.c.b16 %v694, %v693
        %v715 = vpack.c.b16 %v696, %v695
        %v716 = vpack.c.b16 %v698, %v697
        %v717 = vpack.c.b16 %v700, %v699
        %v718 = vpack.c.b16 %v702, %v701
        %735 = vmatprep.subr.bf16.mxu0 0
        %736 = vmatpush1.bf16.msra.mxu0 %v710
        %737 = vmatprep.subr.bf16.mxu0 0
        %738 = vmatpush1.bf16.msra.mxu0 %v709
        %739 = vmatprep.subr.bf16.mxu0 0
        %740 = vmatpush1.bf16.msra.mxu0 %v708
        %741 = vmatprep.subr.bf16.mxu0 0
        %742 = vmatpush1.bf16.msra.mxu0 %v707
        %743 = vmatprep.subr.bf16.mxu0 0
        %744 = vmatpush1.bf16.msra.mxu0 %v706
        %745 = vmatprep.subr.bf16.mxu0 0
        %746 = vmatpush1.bf16.msra.mxu0 %v705
        %747 = vmatprep.subr.bf16.mxu0 0
        %748 = vmatpush1.bf16.msra.mxu0 %v704
        %749 = vmatprep.subr.bf16.mxu0 0
        %750 = vmatpush1.bf16.msra.mxu0 %v703
        %751 = vmatprep.subr.bf16.mxu0 0
        %752 = vmatpush2.bf16.msra.mxu0 %v718
        %753 = vmatprep.subr.bf16.mxu0 0
        %754 = vmatpush2.bf16.msra.mxu0 %v717
        %755 = vmatprep.subr.bf16.mxu0 0
        %756 = vmatpush2.bf16.msra.mxu0 %v716
        %757 = vmatprep.subr.bf16.mxu0 0
        %758 = vmatpush2.bf16.msra.mxu0 %v715
        %759 = vmatprep.subr.bf16.mxu0 0
        %760 = vmatpush2.bf16.msra.mxu0 %v714
        %761 = vmatprep.subr.bf16.mxu0 0
        %762 = vmatpush2.bf16.msra.mxu0 %v713
        %763 = vmatprep.subr.bf16.mxu0 0
        %764 = vmatpush2.bf16.msra.mxu0 %v712
        %765 = vmatprep.subr.bf16.mxu0 0
        %766 = vmatpush2.bf16.msra.mxu0 %v711
        %767 = vmatprep.mubr.bf16.mxu0 %v597
        %768 = vmatmul.mubr.bf16.gmra.mxu0 %v596
        %v769 = vpop.f32.mrf.mxu0
        %v770 = vadd.f32 %v637, %v769
        %v771 = vpop.f32.mrf.mxu0
        %v772 = vpop.f32.mrf.mxu0
        %v773 = vadd.f32 %v637, %v772
        %v774 = vpop.f32.mrf.mxu0
        %775 = vmatprep.mubr.bf16.mxu0 %v599
        %776 = vmatmul.mubr.bf16.gmra.mxu0 %v598
        %v777 = vpop.f32.mrf.mxu0
        %v778 = vadd.f32 %v637, %v777
        %v779 = vpop.f32.mrf.mxu0
        %v780 = vpop.f32.mrf.mxu0
        %v781 = vpop.f32.mrf.mxu0
        %782 = vdwg.mxu0
        %v783 = vmax.f32 %v770, -30.0
        %v784 = vmax.f32 %v773, -30.0
        %v785 = vmax.f32 %v778, -30.0
        %v786 = vsub.f32 0.0, %v783
        %v787 = vsub.f32 0.0, %v784
        %v788 = vsub.f32 0.0, %v785
        %v789 = vmul.f32 %v786, 1.442695
        %v790 = vpow.pop %v789
        %v791 = vmul.f32 %v787, 1.442695
        %v792 = vpow.pop %v791
        %v793 = vmul.f32 %v788, 1.442695
        %v794 = vpow.pop %v793
        %v795 = vadd.f32 %v790, 1.0
        %v796 = vadd.f32 %v792, 1.0
        %v797 = vadd.f32 %v794, 1.0
        %v798 = vrcp.pop %v795
        %v799 = vrcp.pop %v796
        %v800 = vrcp.pop %v797
        %v801 = vmul.f32 %v770, %v798
        %v802 = vmul.f32 %v773, %v799
        %v803 = vmul.f32 %v778, %v800
        %v804 = vpack.c.bf16 %v802, %v801
        %v805 = vpack.c.bf16 %v803, %v803
        %v806 = vld [vmem:[%s5] sm:$0xf]
        %v807 = vld [vmem:[%s5 + $0x4] sm:$0xf]
        %v808 = vld [vmem:[%s5 + $0x8] sm:$0xf]
        %v809 = vld [vmem:[%s5 + $0xc] sm:$0xf]
        %v810 = vld [vmem:[%s5 + $0x10] sm:$0xf]
        %v811 = vld [vmem:[%s5 + $0x14] sm:$0xf]
        %v812 = vld [vmem:[%s5 + $0x18] sm:$0xf]
        %v813 = vld [vmem:[%s5 + $0x1c] sm:$0xf]
        %v814 = vld [vmem:[%s5 + $0x20] sm:$0xf]
        %v815 = vld [vmem:[%s5 + $0x24] sm:$0xf]
        %v816 = vld [vmem:[%s5 + $0x28] sm:$0xf]
        %v817 = vld [vmem:[%s5 + $0x2c] sm:$0xf]
        %v818 = vld [vmem:[%s5 + $0x30] sm:$0xf]
        %v819 = vld [vmem:[%s5 + $0x34] sm:$0xf]
        %v820 = vld [vmem:[%s5 + $0x38] sm:$0xf]
        %v821 = vld [vmem:[%s5 + $0x3c] sm:$0xf]
        %v838 = vunpack.c.l.b16 %v806
        %v839 = vunpack.c.l.b16 %v807
        %v840 = vunpack.c.l.b16 %v808
        %v841 = vunpack.c.l.b16 %v809
        %v842 = vunpack.c.l.b16 %v810
        %v843 = vunpack.c.l.b16 %v811
        %v844 = vunpack.c.l.b16 %v812
        %v845 = vunpack.c.l.b16 %v813
        %v846 = vunpack.c.l.b16 %v814
        %v847 = vunpack.c.l.b16 %v815
        %v848 = vunpack.c.l.b16 %v816
        %v849 = vunpack.c.l.b16 %v817
        %v850 = vunpack.c.l.b16 %v818
        %v851 = vunpack.c.l.b16 %v819
        %v852 = vunpack.c.l.b16 %v820
        %v853 = vunpack.c.l.b16 %v821
        %v854 = vpack.c.b16 %v839, %v838
        %v855 = vpack.c.b16 %v841, %v840
        %v856 = vpack.c.b16 %v843, %v842
        %v857 = vpack.c.b16 %v845, %v844
        %v858 = vpack.c.b16 %v847, %v846
        %v859 = vpack.c.b16 %v849, %v848
        %v860 = vpack.c.b16 %v851, %v850
        %v861 = vpack.c.b16 %v853, %v852
        %870 = vmatprep.subr.bf16.mxu0 0
        %871 = vmatpush1.bf16.msra.mxu0 %v861
        %872 = vmatprep.subr.bf16.mxu0 0
        %873 = vmatpush1.bf16.msra.mxu0 %v860
        %874 = vmatprep.subr.bf16.mxu0 0
        %875 = vmatpush1.bf16.msra.mxu0 %v859
        %876 = vmatprep.subr.bf16.mxu0 0
        %877 = vmatpush1.bf16.msra.mxu0 %v858
        %878 = vmatprep.subr.bf16.mxu0 0
        %879 = vmatpush1.bf16.msra.mxu0 %v857
        %880 = vmatprep.subr.bf16.mxu0 0
        %881 = vmatpush1.bf16.msra.mxu0 %v856
        %882 = vmatprep.subr.bf16.mxu0 0
        %883 = vmatpush1.bf16.msra.mxu0 %v855
        %884 = vmatprep.subr.bf16.mxu0 0
        %885 = vmatpush1.bf16.msra.mxu0 %v854
        %886 = vmatprep.subr.bf16.mxu0 0
        %887 = vmatpush2.bf16.msra.mxu0 0
        %888 = vmatprep.subr.bf16.mxu0 0
        %889 = vmatpush2.bf16.msra.mxu0 0
        %890 = vmatprep.subr.bf16.mxu0 0
        %891 = vmatpush2.bf16.msra.mxu0 0
        %892 = vmatprep.subr.bf16.mxu0 0
        %893 = vmatpush2.bf16.msra.mxu0 0
        %894 = vmatprep.subr.bf16.mxu0 0
        %895 = vmatpush2.bf16.msra.mxu0 0
        %896 = vmatprep.subr.bf16.mxu0 0
        %897 = vmatpush2.bf16.msra.mxu0 0
        %898 = vmatprep.subr.bf16.mxu0 0
        %899 = vmatpush2.bf16.msra.mxu0 0
        %900 = vmatprep.subr.bf16.mxu0 0
        %901 = vmatpush2.bf16.msra.mxu0 0
        %902 = vmatprep.mubr.bf16.mxu0 0
        %903 = vmatmul.mubr.bf16.gmra.mxu0 %v804
        %v904 = vpop.f32.mrf.mxu0
        %v905 = vadd.f32 0.0, %v904
        %v906 = vpop.f32.mrf.mxu0
        %v907 = vpop.f32.mrf.mxu0
        %v908 = vadd.f32 0.0, %v907
        %v909 = vpop.f32.mrf.mxu0
        %910 = vmatprep.mubr.bf16.mxu0 0
        %911 = vmatmul.mubr.bf16.gmra.mxu0 %v805
        %v912 = vpop.f32.mrf.mxu0
        %v913 = vadd.f32 0.0, %v912
        %v914 = vpop.f32.mrf.mxu0
        %v915 = vpop.f32.mrf.mxu0
        %v916 = vpop.f32.mrf.mxu0
        %917 = vdwg.mxu0
        %vm918 = vcmask 64512
        %919 = vst.msk [vmem:[%s382] sm:$0xff] %vm918, %v905
        %920 = vst.msk [vmem:[%s382 + $0x8] sm:$0xff] %vm918, %v908
        %vm921 = vcmask 60416
        %922 = vst.msk [vmem:[%s382 + $0x10] sm:$0xf] %vm921, %v913
        %v923 = vld [vmem:[#allocation2] sm:$0xf]
        %v924 = vld [vmem:[#allocation2 + $0x4] sm:$0xf]
        %v925 = vld [vmem:[#allocation2 + $0x8] sm:$0xf]
        %v926 = vld [vmem:[#allocation2 + $0xc] sm:$0xf]
        %v927 = vld [vmem:[#allocation2 + $0x10] sm:$0xf]
        %v928 = vld [vmem:[#allocation2 + $0x14] sm:$0xf]
        %v929 = vld [vmem:[#allocation2 + $0x18] sm:$0xf]
        %v930 = vld [vmem:[#allocation2 + $0x1c] sm:$0xf]
        %v931 = vld [vmem:[#allocation2 + $0x20] sm:$0xf]
        %v932 = vld [vmem:[#allocation2 + $0x24] sm:$0xf]
        %v933 = vld [vmem:[#allocation2 + $0x28] sm:$0xf]
        %v934 = vld [vmem:[#allocation2 + $0x2c] sm:$0xf]
        %v935 = vld [vmem:[#allocation2 + $0x30] sm:$0xf]
        %v936 = vld [vmem:[#allocation2 + $0x34] sm:$0xf]
        %v937 = vld [vmem:[#allocation2 + $0x38] sm:$0xf]
        %v938 = vld [vmem:[#allocation2 + $0x3c] sm:$0xf]
        %v939 = vld [vmem:[%s7] sm:$0x1]
        %v941 = vlaneseq
        %v942 = vshrl.u32 %v941, 7
        %v943 = vsub.s32 0, %v942
        %v944 = vrot.slane %v939, %v943
        %v947 = vrot.slane %v394, 2
        %v965 = vunpack.c.l.b16 %v923
        %v966 = vunpack.c.l.b16 %v924
        %v967 = vunpack.c.l.b16 %v925
        %v968 = vunpack.c.l.b16 %v926
        %v969 = vunpack.c.l.b16 %v927
        %v970 = vunpack.c.l.b16 %v928
        %v971 = vunpack.c.l.b16 %v929
        %v972 = vunpack.c.l.b16 %v930
        %v973 = vunpack.c.l.b16 %v931
        %v974 = vunpack.c.l.b16 %v932
        %v975 = vunpack.c.l.b16 %v933
        %v976 = vunpack.c.l.b16 %v934
        %v977 = vunpack.c.l.b16 %v935
        %v978 = vunpack.c.l.b16 %v936
        %v979 = vunpack.c.l.b16 %v937
        %v980 = vunpack.c.l.b16 %v938
        %v981 = vpack.c.b16 %v966, %v965
        %v982 = vpack.c.b16 %v968, %v967
        %v983 = vpack.c.b16 %v970, %v969
        %v984 = vpack.c.b16 %v972, %v971
        %v985 = vpack.c.b16 %v974, %v973
        %v986 = vpack.c.b16 %v976, %v975
        %v987 = vpack.c.b16 %v978, %v977
        %v988 = vpack.c.b16 %v980, %v979
        %997 = vmatprep.subr.bf16.mxu0 0
        %998 = vmatpush1.bf16.msra.mxu0 %v988
        %999 = vmatprep.subr.bf16.mxu0 0
        %1000 = vmatpush1.bf16.msra.mxu0 %v987
        %1001 = vmatprep.subr.bf16.mxu0 0
        %1002 = vmatpush1.bf16.msra.mxu0 %v986
        %1003 = vmatprep.subr.bf16.mxu0 0
        %1004 = vmatpush1.bf16.msra.mxu0 %v985
        %1005 = vmatprep.subr.bf16.mxu0 0
        %1006 = vmatpush1.bf16.msra.mxu0 %v984
        %1007 = vmatprep.subr.bf16.mxu0 0
        %1008 = vmatpush1.bf16.msra.mxu0 %v983
        %1009 = vmatprep.subr.bf16.mxu0 0
        %1010 = vmatpush1.bf16.msra.mxu0 %v982
        %1011 = vmatprep.subr.bf16.mxu0 0
        %1012 = vmatpush1.bf16.msra.mxu0 %v981
        %1013 = vmatprep.subr.bf16.mxu0 0
        %1014 = vmatpush2.bf16.msra.mxu0 0
        %1015 = vmatprep.subr.bf16.mxu0 0
        %1016 = vmatpush2.bf16.msra.mxu0 0
        %1017 = vmatprep.subr.bf16.mxu0 0
        %1018 = vmatpush2.bf16.msra.mxu0 0
        %1019 = vmatprep.subr.bf16.mxu0 0
        %1020 = vmatpush2.bf16.msra.mxu0 0
        %1021 = vmatprep.subr.bf16.mxu0 0
        %1022 = vmatpush2.bf16.msra.mxu0 0
        %1023 = vmatprep.subr.bf16.mxu0 0
        %1024 = vmatpush2.bf16.msra.mxu0 0
        %1025 = vmatprep.subr.bf16.mxu0 0
        %1026 = vmatpush2.bf16.msra.mxu0 0
        %1027 = vmatprep.subr.bf16.mxu0 0
        %1028 = vmatpush2.bf16.msra.mxu0 0
        %1029 = vmatprep.mubr.bf16.mxu0 0
        %1030 = vmatmul.mubr.bf16.gmra.mxu0 %v947
        %v1031 = vpop.f32.mrf.mxu0
        %v1032 = vadd.f32 %v944, %v1031
        %v1033 = vpop.f32.mrf.mxu0
        %v1034 = vpop.f32.mrf.mxu0
        %v1035 = vadd.f32 %v944, %v1034
        %v1036 = vpop.f32.mrf.mxu0
        %1037 = vdwg.mxu0
        %v1038 = vmax.f32 %v1032, -30.0
        %v1039 = vmax.f32 %v1035, -30.0
        %v1040 = vsub.f32 0.0, %v1038
        %v1041 = vsub.f32 0.0, %v1039
        %v1042 = vmul.f32 %v1040, 1.442695
        %v1043 = vpow.pop %v1042
        %v1044 = vmul.f32 %v1041, 1.442695
        %v1045 = vpow.pop %v1044
        %v1046 = vadd.f32 %v1043, 1.0
        %v1047 = vadd.f32 %v1045, 1.0
        %v1048 = vrcp.pop %v1046
        %v1049 = vrcp.pop %v1047
        %v1050 = vmul.f32 %v1032, %v1048
        %v1051 = vmul.f32 %v1035, %v1049
        %v1052 = vpack.c.bf16 %v1051, %v1050
        %v1053 = vld [vmem:[%s8] sm:$0xf]
        %v1054 = vld [vmem:[%s8 + $0x4] sm:$0xf]
        %v1055 = vld [vmem:[%s8 + $0x8] sm:$0xf]
        %v1056 = vld [vmem:[%s8 + $0xc] sm:$0xf]
        %v1057 = vld [vmem:[%s8 + $0x10] sm:$0xf]
        %v1058 = vld [vmem:[%s8 + $0x14] sm:$0xf]
        %v1059 = vld [vmem:[%s8 + $0x18] sm:$0xf]
        %v1060 = vld [vmem:[%s8 + $0x1c] sm:$0xf]
        %v1061 = vld [vmem:[%s8 + $0x20] sm:$0xf]
        %v1062 = vld [vmem:[%s8 + $0x24] sm:$0xf]
        %v1063 = vld [vmem:[%s8 + $0x28] sm:$0xf]
        %v1064 = vld [vmem:[%s8 + $0x2c] sm:$0xf]
        %v1065 = vld [vmem:[%s8 + $0x30] sm:$0xf]
        %v1066 = vld [vmem:[%s8 + $0x34] sm:$0xf]
        %v1067 = vld [vmem:[%s8 + $0x38] sm:$0xf]
        %v1068 = vld [vmem:[%s8 + $0x3c] sm:$0xf]
        %v1085 = vunpack.c.l.b16 %v1053
        %v1086 = vunpack.c.l.b16 %v1054
        %v1087 = vunpack.c.l.b16 %v1055
        %v1088 = vunpack.c.l.b16 %v1056
        %v1089 = vunpack.c.l.b16 %v1057
        %v1090 = vunpack.c.l.b16 %v1058
        %v1091 = vunpack.c.l.b16 %v1059
        %v1092 = vunpack.c.l.b16 %v1060
        %v1093 = vunpack.c.l.b16 %v1061
        %v1094 = vunpack.c.l.b16 %v1062
        %v1095 = vunpack.c.l.b16 %v1063
        %v1096 = vunpack.c.l.b16 %v1064
        %v1097 = vunpack.c.l.b16 %v1065
        %v1098 = vunpack.c.l.b16 %v1066
        %v1099 = vunpack.c.l.b16 %v1067
        %v1100 = vunpack.c.l.b16 %v1068
        %v1101 = vpack.c.b16 %v1086, %v1085
        %v1102 = vpack.c.b16 %v1088, %v1087
        %v1103 = vpack.c.b16 %v1090, %v1089
        %v1104 = vpack.c.b16 %v1092, %v1091
        %v1105 = vpack.c.b16 %v1094, %v1093
        %v1106 = vpack.c.b16 %v1096, %v1095
        %v1107 = vpack.c.b16 %v1098, %v1097
        %v1108 = vpack.c.b16 %v1100, %v1099
        %1117 = vmatprep.subr.bf16.mxu0 0
        %1118 = vmatpush1.bf16.msra.mxu0 %v1108
        %1119 = vmatprep.subr.bf16.mxu0 0
        %1120 = vmatpush1.bf16.msra.mxu0 %v1107
        %1121 = vmatprep.subr.bf16.mxu0 0
        %1122 = vmatpush1.bf16.msra.mxu0 %v1106
        %1123 = vmatprep.subr.bf16.mxu0 0
        %1124 = vmatpush1.bf16.msra.mxu0 %v1105
        %1125 = vmatprep.subr.bf16.mxu0 0
        %1126 = vmatpush1.bf16.msra.mxu0 %v1104
        %1127 = vmatprep.subr.bf16.mxu0 0
        %1128 = vmatpush1.bf16.msra.mxu0 %v1103
        %1129 = vmatprep.subr.bf16.mxu0 0
        %1130 = vmatpush1.bf16.msra.mxu0 %v1102
        %1131 = vmatprep.subr.bf16.mxu0 0
        %1132 = vmatpush1.bf16.msra.mxu0 %v1101
        %1133 = vmatprep.subr.bf16.mxu0 0
        %1134 = vmatpush2.bf16.msra.mxu0 0
        %1135 = vmatprep.subr.bf16.mxu0 0
        %1136 = vmatpush2.bf16.msra.mxu0 0
        %1137 = vmatprep.subr.bf16.mxu0 0
        %1138 = vmatpush2.bf16.msra.mxu0 0
        %1139 = vmatprep.subr.bf16.mxu0 0
        %1140 = vmatpush2.bf16.msra.mxu0 0
        %1141 = vmatprep.subr.bf16.mxu0 0
        %1142 = vmatpush2.bf16.msra.mxu0 0
        %1143 = vmatprep.subr.bf16.mxu0 0
        %1144 = vmatpush2.bf16.msra.mxu0 0
        %1145 = vmatprep.subr.bf16.mxu0 0
        %1146 = vmatpush2.bf16.msra.mxu0 0
        %1147 = vmatprep.subr.bf16.mxu0 0
        %1148 = vmatpush2.bf16.msra.mxu0 0
        %1149 = vmatprep.mubr.bf16.mxu0 0
        %1150 = vmatmul.mubr.bf16.gmra.mxu0 %v1052
        %v1151 = vpop.f32.mrf.mxu0
        %v1152 = vadd.f32 0.0, %v1151
        %v1153 = vpop.f32.mrf.mxu0
        %v1154 = vpop.f32.mrf.mxu0
        %v1155 = vadd.f32 0.0, %v1154
        %v1156 = vpop.f32.mrf.mxu0
        %1157 = vdwg.mxu0
        %1158 = vst.msk [vmem:[%s387] sm:$0xff] %vm918, %v1152
        %vm1159 = vcmask 58368
        %1160 = vst.msk [vmem:[%s387 + $0x8] sm:$0x3] %vm1159, %v1155
        %p1161 = scmp.lt.s32.totalorder %s23, 1
        %s1162 = scalar_select %p1161, %s23, 1
        %s1163 = smul.addr %s1162, 3
        %s1164 = smul.addr %s1163, 8
        %s1165 = scalar_lea.vmem %s9, %s1164
        %p1166 = scmp.lt.s32.totalorder %s23, 1
        %s1167 = scalar_select %p1166, %s23, 1
        %s1168 = smul.addr %s1167, 2
        %s1169 = smul.addr %s1168, 8
        %s1170 = scalar_lea.vmem %s10, %s1169
        // Predicated region
        $region61: #{tpu_custom_call.1} parent=55 // pred_check
          %p1171 = pneg %p235
        $region62: #{tpu_custom_call.1} parent=55 // pred_check_branch
          %1173 = sbr.rel (%p1171) target = $region64
        $region63: #{tpu_custom_call.1} parent=55 // pred_region
          _
        $region64: #{tpu_custom_call.1} parent=55 // pred_fallthru
          _
        // Predicated region
        $region65: #{tpu_custom_call.1} parent=55 // pred_check
          %p1174 = pneg %p261
        $region66: #{tpu_custom_call.1} parent=55 // pred_check_branch
          %1176 = sbr.rel (%p1174) target = $region68
        $region67: #{tpu_custom_call.1} parent=55 // pred_region
          _
        $region68: #{tpu_custom_call.1} parent=55 // pred_fallthru
          _
      $region56: #{tpu_custom_call.1} parent=5 // pred_fallthru
        _
      %p1177 = scmp.le.s32.totalorder 2, %s18
      // Predicated region
      $region69: #{tpu_custom_call.1} parent=5 // pred_check
        %p1178 = pneg %p1177
      $region70: #{tpu_custom_call.1} parent=5 // pred_check_branch
        %1180 = sbr.rel (%p1178) target = $region72
      $region71: #{tpu_custom_call.1} parent=5 // pred_region
        %s1181 = ssub.s32 %s18, 2
        // Predicated region
        $region73: #{tpu_custom_call.1} parent=71 // pred_check
          %p1182 = pneg %p241
        $region74: #{tpu_custom_call.1} parent=71 // pred_check_branch
          %1184 = sbr.rel (%p1182) target = $region76
        $region75: #{tpu_custom_call.1} parent=71 // pred_region
          %p1185 = scmp.lt.s32.totalorder %s24, 1
          %s1186 = scalar_select %p1185, %s24, 1
          %s1187 = smul.addr %s1186, 3
          %s1188 = smul.addr %s1187, 8
          %s1189 = scalar_lea.vmem %s9, %s1188
        $region76: #{tpu_custom_call.1} parent=71 // pred_fallthru
          _
        // Predicated region
        $region77: #{tpu_custom_call.1} parent=71 // pred_check
          %p1190 = pneg %p267
        $region78: #{tpu_custom_call.1} parent=71 // pred_check_branch
          %1192 = sbr.rel (%p1190) target = $region80
        $region79: #{tpu_custom_call.1} parent=71 // pred_region
          %p1193 = scmp.lt.s32.totalorder %s24, 1
          %s1194 = scalar_select %p1193, %s24, 1
          %s1195 = smul.addr %s1194, 2
          %s1196 = smul.addr %s1195, 8
          %s1197 = scalar_lea.vmem %s10, %s1196
        $region80: #{tpu_custom_call.1} parent=71 // pred_fallthru
          _
      $region72: #{tpu_custom_call.1} parent=5 // pred_fallthru
        _
    $region6: #{tpu_custom_call.1} parent=1 // loop_footer
      %s22 = sadd.s32 1, %s18
    $region7: #{tpu_custom_call.1} parent=1 // loop_footer_branch
      %17 = sbr.rel target = $region3
    $region8: #{tpu_custom_call.1} parent=1 // loop_exit
      _
    %1198 = vsyncpa [#allocation3], 1
    %s1199 = scalar_lea.sflag [#allocation3], 1
    %1200 = vsyncpa %s1199, 1

</llo_original>
